<compile_context>
chip_gen: v5e
topology: v5e:2x2
jax: 0.10.0
libtpu: 0.0.40
codegen_flags: <defaults>
</compile_context>

<pallas_src>
import jax
import jax.numpy as jnp
from jax import lax
from jax.experimental import pallas as pl
from jax.experimental.pallas import tpu as pltpu

_EPS = 1e-5
_LANE = 128
# Budget for one (rows, td) f32 x-tile.  With double-buffered in+out plus the
# in-kernel f32 temporaries the total VMEM footprint stays ~10-12 MiB.
_TILE_BUDGET_BYTES = 2 * 1024 * 1024
_VMEM_LIMIT_BYTES = 32 * 1024 * 1024


# ----------------------------------------------------------------------------
# Kernel: per-column batchnorm over rows on a (rows, cols_tile) block
# ----------------------------------------------------------------------------
def _col_bn_kernel(x_ref, gamma_ref, beta_ref, o_ref):
    # x: (R, T) tile; gamma/beta: (1, T).  Column tiles are statistically
    # independent; the full row (reduction) extent lives in this block.
    x = x_ref[...].astype(jnp.float32)
    gamma = gamma_ref[...].astype(jnp.float32)
    beta = beta_ref[...].astype(jnp.float32)

    mean = jnp.mean(x, axis=0, keepdims=True)               # (1, T)
    xc = x - mean                                           # reused below
    var = jnp.mean(xc * xc, axis=0, keepdims=True)          # biased variance
    inv = lax.rsqrt(var + _EPS)                             # EUP slot (free-ish)
    scale = inv * gamma                                     # (1, T)
    o_ref[...] = (xc * scale + beta).astype(o_ref.dtype)    # 2 VALU ops / elem


# ----------------------------------------------------------------------------
# Wrappers
# ----------------------------------------------------------------------------
def _pick_col_tile(nrows, ncols):
    """Largest lane-dense (multiple-of-128) column tile that divides ncols and
    keeps the (nrows, tile) f32 block under budget.  Falls back to the full
    column extent when ncols is not a multiple of 128 (full-extent blocks
    always satisfy the (8,128) BlockSpec rule)."""
    if ncols % _LANE != 0:
        return ncols
    best = _LANE
    t = _LANE
    while t <= ncols:
        if ncols % t == 0 and nrows * t * 4 <= _TILE_BUDGET_BYTES:
            best = t
        t += _LANE
    return best


def _col_batchnorm_2d(x2d, gamma, beta):
    """x2d: (R, C); gamma, beta: (C,).  Per-column BN reduced over rows."""
    R, C = x2d.shape
    td = _pick_col_tile(R, C)
    grid = (C // td,)
    gamma2 = gamma.reshape(1, C).astype(jnp.float32)
    beta2 = beta.reshape(1, C).astype(jnp.float32)
    return pl.pallas_call(
        _col_bn_kernel,
        out_shape=jax.ShapeDtypeStruct((R, C), x2d.dtype),
        grid=grid,
        in_specs=[
            pl.BlockSpec((R, td), lambda j: (0, j)),
            pl.BlockSpec((1, td), lambda j: (0, j)),
            pl.BlockSpec((1, td), lambda j: (0, j)),
        ],
        out_specs=pl.BlockSpec((R, td), lambda j: (0, j)),
        compiler_params=pltpu.CompilerParams(
            dimension_semantics=("parallel",),
            vmem_limit_bytes=_VMEM_LIMIT_BYTES,
        ),
    )(x2d, gamma2, beta2)


def kw_batchnorm_eachkw(keywords, gamma_kd, beta_kd):
    """keywords: (B, K, D); gamma_kd, beta_kd: (K, D).

    Per-(keyword, dim) statistics reduced over the batch.  Flattened to a
    (B, K*D) 2-D view so the lane axis is K*D (lane-dense for small D)."""
    B, K, D = keywords.shape
    x2d = keywords.reshape(B, K * D)
    out2d = _col_batchnorm_2d(x2d, gamma_kd.reshape(K * D),
                              beta_kd.reshape(K * D))
    return out2d.reshape(B, K, D)


def kw_batchnorm_same(keywords, gamma_d, beta_d):
    """keywords: (B, K, D); gamma_d, beta_d: (D,).

    Per-dim statistics reduced over (batch, kw_num): equivalent to
    nn.BatchNorm1d(kw_dim) on keywords.permute(0, 2, 1) in train mode."""
    B, K, D = keywords.shape
    x2d = keywords.reshape(B * K, D)
    out2d = _col_batchnorm_2d(x2d, gamma_d, beta_d)
    return out2d.reshape(B, K, D)


class KwBatchNorm:
    """JAX/Pallas port of Kw_BatchNorm (forward, training-mode batch stats)."""

    def __init__(self, kw_num, kw_dim, batchnorm_type, init_bias, init_scale,
                 std_scale=1, learnable=True, parallel=False):
        assert batchnorm_type in ("eachKw", "same")
        self.kw_num = kw_num
        self.kw_dim = kw_dim
        self.batchnorm_type = batchnorm_type
        self.parallel = parallel
        if not isinstance(std_scale, (list, tuple)):
            std_scale = [std_scale] * kw_num
        std_scale = jnp.asarray(std_scale, jnp.float32)     # (K,)

        init_bias = jnp.asarray(init_bias, jnp.float32)     # (D,)
        init_scale = jnp.asarray(init_scale, jnp.float32)   # (D,)

        if batchnorm_type == "eachKw":
            if parallel:
                # parallel variant repeats std_scale[0] for every keyword
                gamma_kd = std_scale[0] * jnp.broadcast_to(
                    init_scale[None, :], (kw_num, kw_dim))
            else:
                gamma_kd = std_scale[:, None] * init_scale[None, :]  # (K, D)
            self.gamma = gamma_kd
            self.beta = jnp.broadcast_to(init_bias[None, :], (kw_num, kw_dim))
        else:  # "same"
            self.gamma = std_scale[0] * init_scale  # (D,)
            self.beta = init_bias                   # (D,)

    def __call__(self, keywords, seq_lens=None):
        assert keywords.ndim == 3
        assert keywords.shape[2] == self.kw_dim
        if seq_lens is None:
            assert keywords.shape[1] == self.kw_num
        if self.batchnorm_type == "eachKw":
            return kw_batchnorm_eachkw(keywords, self.gamma, self.beta)
        else:
            if seq_lens is not None:
                # TODO(synk): ragged seq_lens path not implemented in Pallas.
                raise NotImplementedError("seq_lens path not implemented")
            return kw_batchnorm_same(keywords, self.gamma, self.beta)


# ----------------------------------------------------------------------------
# Reference (plain JAX) for correctness check
# ----------------------------------------------------------------------------
def _ref_eachkw(x, gamma_kd, beta_kd):
    mean = jnp.mean(x, axis=0, keepdims=True)
    var = jnp.mean((x - mean) ** 2, axis=0, keepdims=True)
    return (x - mean) / jnp.sqrt(var + _EPS) * gamma_kd[None] + beta_kd[None]


def _ref_same(x, gamma_d, beta_d):
    mean = jnp.mean(x, axis=(0, 1), keepdims=True)
    var = jnp.mean((x - mean) ** 2, axis=(0, 1), keepdims=True)
    return ((x - mean) / jnp.sqrt(var + _EPS)
            * gamma_d[None, None, :] + beta_d[None, None, :])


if __name__ == "__main__":
    key = jax.random.PRNGKey(0)
    k_x, k_bias, k_scale = jax.random.split(key, 3)

    B, K, D = 4, 8, 32          # batch, kw_num, kw_dim
    x = jax.random.normal(k_x, (B, K, D), dtype=jnp.float32)

    # Deterministic "token embedding" statistics used to init BN weight/bias.
    init_bias = jax.random.normal(k_bias, (D,), dtype=jnp.float32) * 0.1
    init_scale = jnp.abs(jax.random.normal(k_scale, (D,), dtype=jnp.float32)) + 0.5
    std_scale = [float(s) for s in jnp.linspace(0.5, 1.5, K)]

    # --- eachKw variant (non-parallel) -----------------------------------
    bn_each = KwBatchNorm(K, D, "eachKw", init_bias, init_scale,
                          std_scale=std_scale)
    out_each = jax.block_until_ready(bn_each(x))
    ref_each = _ref_eachkw(x, bn_each.gamma, bn_each.beta)
    assert out_each.shape == (B, K, D)
    assert jnp.allclose(out_each, ref_each, atol=1e-4, rtol=1e-4)

    # --- eachKw variant (parallel) ----------------------------------------
    bn_par = KwBatchNorm(K, D, "eachKw", init_bias, init_scale,
                         std_scale=std_scale, parallel=True)
    out_par = jax.block_until_ready(bn_par(x))
    ref_par = _ref_eachkw(x, bn_par.gamma, bn_par.beta)
    assert out_par.shape == (B, K, D)
    assert jnp.allclose(out_par, ref_par, atol=1e-4, rtol=1e-4)

    # --- same variant ------------------------------------------------------
    bn_same = KwBatchNorm(K, D, "same", init_bias, init_scale,
                          std_scale=std_scale)
    out_same = jax.block_until_ready(bn_same(x))
    ref_same = _ref_same(x, bn_same.gamma, bn_same.beta)
    assert out_same.shape == (B, K, D)
    assert jnp.allclose(out_same, ref_same, atol=1e-4, rtol=1e-4)

    print("KERNEL_OK")
</pallas_src>

<mosaic_0001>
module attributes {stable_mosaic.version = 11 : i64} {
  func.func @_col_bn_kernel(%arg0: i32, %arg1: memref<4x256xf32, #tpu.memory_space<vmem>>, %arg2: memref<1x256xf32, #tpu.memory_space<vmem>>, %arg3: memref<1x256xf32, #tpu.memory_space<vmem>>, %arg4: memref<4x256xf32, #tpu.memory_space<vmem>>) attributes {dimension_semantics = [#tpu.dimension_semantics<parallel>], iteration_bounds = array<i64: 1>, scalar_prefetch = 0 : i64, scratch_operands = 0 : i64, tpu.core_type = #tpu.core_type<tc>, window_params = [{transform_indices = @transform_0, window_bounds = array<i64: 4, 256>}, {transform_indices = @transform_1, window_bounds = array<i64: 1, 256>}, {transform_indices = @transform_2, window_bounds = array<i64: 1, 256>}, {transform_indices = @transform_3, window_bounds = array<i64: 4, 256>}]} {
    %c0 = arith.constant 0 : index
    %c0_0 = arith.constant 0 : index
    %0 = vector.load %arg1[%c0, %c0_0] : memref<4x256xf32, #tpu.memory_space<vmem>>, vector<4x256xf32>
    %c0_1 = arith.constant 0 : index
    %c0_2 = arith.constant 0 : index
    %1 = vector.load %arg2[%c0_1, %c0_2] : memref<1x256xf32, #tpu.memory_space<vmem>>, vector<1x256xf32>
    %c0_3 = arith.constant 0 : index
    %c0_4 = arith.constant 0 : index
    %2 = vector.load %arg3[%c0_3, %c0_4] : memref<1x256xf32, #tpu.memory_space<vmem>>, vector<1x256xf32>
    %cst = arith.constant dense<0.000000e+00> : vector<256xf32>
    %3 = vector.multi_reduction <add>, %0, %cst [0] : vector<4x256xf32> to vector<256xf32>
    %4 = vector.shape_cast %3 : vector<256xf32> to vector<1x256xf32>
    %cst_5 = arith.constant 4.000000e+00 : f32
    %5 = vector.broadcast %cst_5 : f32 to vector<1x256xf32>
    %6 = arith.divf %4, %5 : vector<1x256xf32>
    %7 = vector.broadcast %6 : vector<1x256xf32> to vector<4x256xf32>
    %8 = arith.subf %0, %7 : vector<4x256xf32>
    %9 = arith.mulf %8, %8 : vector<4x256xf32>
    %cst_6 = arith.constant dense<0.000000e+00> : vector<256xf32>
    %10 = vector.multi_reduction <add>, %9, %cst_6 [0] : vector<4x256xf32> to vector<256xf32>
    %11 = vector.shape_cast %10 : vector<256xf32> to vector<1x256xf32>
    %cst_7 = arith.constant 4.000000e+00 : f32
    %12 = vector.broadcast %cst_7 : f32 to vector<1x256xf32>
    %13 = arith.divf %11, %12 : vector<1x256xf32>
    %cst_8 = arith.constant 9.99999974E-6 : f32
    %14 = vector.broadcast %cst_8 : f32 to vector<1x256xf32>
    %15 = arith.addf %13, %14 : vector<1x256xf32>
    %16 = math.rsqrt %15 : vector<1x256xf32>
    %17 = arith.mulf %16, %1 : vector<1x256xf32>
    %18 = vector.broadcast %17 : vector<1x256xf32> to vector<4x256xf32>
    %19 = arith.mulf %8, %18 : vector<4x256xf32>
    %20 = vector.broadcast %2 : vector<1x256xf32> to vector<4x256xf32>
    %21 = arith.addf %19, %20 : vector<4x256xf32>
    %c0_9 = arith.constant 0 : index
    %c0_10 = arith.constant 0 : index
    %22 = vector.load %arg4[%c0_9, %c0_10] : memref<4x256xf32, #tpu.memory_space<vmem>>, vector<4x256xf32>
    tpu.vector_store %arg4[%c0_9, %c0_10], %21 {strides = array<i32>} : memref<4x256xf32, #tpu.memory_space<vmem>>, vector<4x256xf32>,
    return
  }
  func.func @transform_0(%arg0: i32) -> (i32, i32) {
    %c0_i32 = arith.constant 0 : i32
    %c0_i32_0 = arith.constant 0 : i32
    return %c0_i32, %arg0 : i32, i32
  }
  func.func @transform_1(%arg0: i32) -> (i32, i32) {
    %c0_i32 = arith.constant 0 : i32
    %c0_i32_0 = arith.constant 0 : i32
    return %c0_i32, %arg0 : i32, i32
  }
  func.func @transform_2(%arg0: i32) -> (i32, i32) {
    %c0_i32 = arith.constant 0 : i32
    %c0_i32_0 = arith.constant 0 : i32
    return %c0_i32, %arg0 : i32, i32
  }
  func.func @transform_3(%arg0: i32) -> (i32, i32) {
    %c0_i32 = arith.constant 0 : i32
    %c0_i32_0 = arith.constant 0 : i32
    return %c0_i32, %arg0 : i32, i32
  }
}

</mosaic_0001>

<llo_original>
// kernel: tpu_custom_call.1
$region0: #{tpu_custom_call.1}
  #allocation0 [shape = 'u32[]', space=smem, size = 0x4, offset = 0x4, fixed_abs, tag = 'smem constant byte address 0x4 - core index']
  #allocation1 [shape = 'u32[72,128]{1,0:T(1,128)}', space=vmem, size = 0x9000, scoped, tag = 'internal scratch']
  %s0 = inlined_call_operand.hbm [shape: f32[4,256], index: 0, kind: input, shape index: {}]
  %s1 = inlined_call_operand.hbm [shape: f32[1,256], index: 1, kind: input, shape index: {}]
  %s2 = inlined_call_operand.hbm [shape: f32[1,256], index: 2, kind: input, shape index: {}]
  %s3 = inlined_call_operand.hbm [shape: f32[4,256], index: 3, kind: output, shape index: {}]
  %s4 = sld [smem:[#allocation0]]
  $region34: #{tpu_custom_call.1} parent=0
    _
  %s6 = ssub.s32 1, %s4
  %s7 = scalar_select 0, %s6, %s4
  $region1: #{tpu_custom_call.1} parent=0
    #allocation2 [shape = 'u8[4096]{0}', space=vmem, size = 0x1000, scoped, tag = 'input window, operand 0, single buffered']
    #allocation3 [shape = 's32[1]{0}', space=sflag, size = 0x4, scoped, tag = 'scoped memory for tpu_custom_call.1']
    #allocation4 [shape = 's32[1]{0}', space=sflag, size = 0x4, scoped, tag = 'scoped memory for tpu_custom_call.1']
    #allocation5 [shape = 'u8[1024]{0}', space=vmem, size = 0x400, scoped, tag = 'input window, operand 1, single buffered']
    #allocation6 [shape = 's32[1]{0}', space=sflag, size = 0x4, scoped, tag = 'scoped memory for tpu_custom_call.1']
    #allocation7 [shape = 'u8[1024]{0}', space=vmem, size = 0x400, scoped, tag = 'input window, operand 2, single buffered']
    #allocation8 [shape = 'u8[4096]{0}', space=vmem, size = 0x1000, scoped, tag = 'output window, operand 0, single buffered']
    %8 = vsyncpa [#allocation3], 0
    %9 = vsyncpa [#allocation6], 0
    %10 = vsyncpa [#allocation4], 0
    // Predicated region
    $region2: #{tpu_custom_call.1} parent=1 // pred_check
      _
    $region3: #{tpu_custom_call.1} parent=1 // pred_check_branch
      %12 = sbr.rel (0) target = $region5
    $region4: #{tpu_custom_call.1} parent=1 // pred_region
      %14 = vsyncadd [#allocation3], 0
      %s16 = sshll.u32 %s0, 4
      %s17 = int_to_ptr.hbm [resolvable:$true] %s16
      %s18 = sshll.u32 [#allocation2], 4
      %s19 = int_to_ptr.vmem [resolvable:$true] %s18
      %21 = dma.hbm_to_vmem [thread:$0]  %s17, 128, %s19, [#allocation3]
    $region5: #{tpu_custom_call.1} parent=1 // pred_fallthru
      _
    // Predicated region
    $region6: #{tpu_custom_call.1} parent=1 // pred_check
      _
    $region7: #{tpu_custom_call.1} parent=1 // pred_check_branch
      %23 = sbr.rel (0) target = $region9
    $region8: #{tpu_custom_call.1} parent=1 // pred_region
      %25 = vsyncadd [#allocation6], 0
      %s27 = sshll.u32 %s1, 4
      %s28 = int_to_ptr.hbm [resolvable:$true] %s27
      %s29 = sshll.u32 [#allocation5], 4
      %s30 = int_to_ptr.vmem [resolvable:$true] %s29
      %32 = dma.hbm_to_vmem [thread:$0]  %s28, 32, %s30, [#allocation6]
    $region9: #{tpu_custom_call.1} parent=1 // pred_fallthru
      _
    // Predicated region
    $region10: #{tpu_custom_call.1} parent=1 // pred_check
      _
    $region11: #{tpu_custom_call.1} parent=1 // pred_check_branch
      %34 = sbr.rel (0) target = $region13
    $region12: #{tpu_custom_call.1} parent=1 // pred_region
      %36 = vsyncadd [#allocation6], 0
      %s38 = sshll.u32 %s2, 4
      %s39 = int_to_ptr.hbm [resolvable:$true] %s38
      %s40 = sshll.u32 [#allocation7], 4
      %s41 = int_to_ptr.vmem [resolvable:$true] %s40
      %43 = dma.hbm_to_vmem [thread:$0]  %s39, 32, %s41, [#allocation6]
    $region13: #{tpu_custom_call.1} parent=1 // pred_fallthru
      _
    // Predicated region
    $region14: #{tpu_custom_call.1} parent=1 // pred_check
      _
    $region15: #{tpu_custom_call.1} parent=1 // pred_check_branch
      %45 = sbr.rel (0) target = $region17
    $region16: #{tpu_custom_call.1} parent=1 // pred_region
      %47 = dma.done [#allocation3], 128
    $region17: #{tpu_custom_call.1} parent=1 // pred_fallthru
      _
    // Predicated region
    $region18: #{tpu_custom_call.1} parent=1 // pred_check
      _
    $region19: #{tpu_custom_call.1} parent=1 // pred_check_branch
      %49 = sbr.rel (0) target = $region21
    $region20: #{tpu_custom_call.1} parent=1 // pred_region
      %51 = dma.done [#allocation6], 32
    $region21: #{tpu_custom_call.1} parent=1 // pred_fallthru
      _
    // Predicated region
    $region22: #{tpu_custom_call.1} parent=1 // pred_check
      _
    $region23: #{tpu_custom_call.1} parent=1 // pred_check_branch
      %53 = sbr.rel (0) target = $region25
    $region24: #{tpu_custom_call.1} parent=1 // pred_region
      %55 = dma.done [#allocation6], 32
    $region25: #{tpu_custom_call.1} parent=1 // pred_fallthru
      _
    %v56 = vld [vmem:[#allocation2] sm:$0xff]
    %v57 = vld [vmem:[#allocation5] sm:$0x3]
    %v58 = vld [vmem:[#allocation7] sm:$0x3]
    %60 = vst [vmem:[#allocation1] ss:$2 sm:$0xff] %v56
    %v61 = vld.sshfl [vmem:[#allocation1] sm:$0xff pattern:$0x75316420]
    %v62 = vld.sshfl [vmem:[#allocation1 + $0x8] sm:$0xff pattern:$0x75316420]
    %vm65 = vcmask 1043456
    %v66 = vsel %vm65, %v61, 0.0
    %v67 = vrot.slane %v66, 4
    %v68 = vadd.f32 %v66, %v67
    %v69 = vrot.slane %v68, 2
    %v70 = vadd.f32 %v68, %v69
    %v71 = vrot.slane %v70, 1
    %v72 = vadd.f32 %v70, %v71
    %v73 = vsel %vm65, %v62, 0.0
    %v74 = vrot.slane %v73, 4
    %v75 = vadd.f32 %v73, %v74
    %v76 = vrot.slane %v75, 2
    %v77 = vadd.f32 %v75, %v76
    %v78 = vrot.slane %v77, 1
    %v79 = vadd.f32 %v77, %v78
    %v80 = vrcp.pop 4.0
    %v81 = vmul.f32 4.0, %v80
    %v82 = vsub.f32 1.0, %v81
    %v83 = vmul.f32 %v80, %v82
    %v84 = vadd.f32 %v80, %v83
    %vm85 = vweird.f32 %v80
    %v86 = vsel %vm85, %v80, %v84
    %v87 = vmul.f32 %v72, %v86
    %v88 = vmul.f32 %v79, %v86
    %v91 = vrot.slane %v88, 4
    %v92 = vsel %vm65, %v87, %v91
    %v94 = vsub.f32 %v56, %v92
    %v95 = vmul.f32 %v94, %v94
    %97 = vst [vmem:[#allocation1] ss:$2 sm:$0xff] %v95
    %v98 = vld.sshfl [vmem:[#allocation1] sm:$0xff pattern:$0x75316420]
    %v99 = vld.sshfl [vmem:[#allocation1 + $0x8] sm:$0xff pattern:$0x75316420]
    %v102 = vsel %vm65, %v98, 0.0
    %v103 = vrot.slane %v102, 4
    %v104 = vadd.f32 %v102, %v103
    %v105 = vrot.slane %v104, 2
    %v106 = vadd.f32 %v104, %v105
    %v107 = vrot.slane %v106, 1
    %v108 = vadd.f32 %v106, %v107
    %v109 = vsel %vm65, %v99, 0.0
    %v110 = vrot.slane %v109, 4
    %v111 = vadd.f32 %v109, %v110
    %v112 = vrot.slane %v111, 2
    %v113 = vadd.f32 %v111, %v112
    %v114 = vrot.slane %v113, 1
    %v115 = vadd.f32 %v113, %v114
    %v116 = vmul.f32 %v108, %v86
    %v117 = vmul.f32 %v115, %v86
    %v118 = vadd.f32 %v116, 1e-05
    %v119 = vadd.f32 %v117, 1e-05
    %v120 = vrsqrt.pop %v118
    %v121 = vmul.f32 %v120, %v118
    %v122 = vmul.f32 %v121, %v120
    %v123 = vmul.f32 0.5, %v122
    %v124 = vsub.f32 1.5, %v123
    %v125 = vmul.f32 %v120, %v124
    %vm126 = vweird.f32 %v118
    %vm127 = vweird.f32 %v120
    %vm128 = vmor %vm126, %vm127
    %v129 = vsel %vm128, %v120, %v125
    %v130 = vrsqrt.pop %v119
    %v131 = vmul.f32 %v130, %v119
    %v132 = vmul.f32 %v131, %v130
    %v133 = vmul.f32 0.5, %v132
    %v134 = vsub.f32 1.5, %v133
    %v135 = vmul.f32 %v130, %v134
    %vm136 = vweird.f32 %v119
    %vm137 = vweird.f32 %v130
    %vm138 = vmor %vm136, %vm137
    %v139 = vsel %vm138, %v130, %v135
    %v141 = vperm.slane %v57, 0
    %v142 = vperm.slane %v57, 1
    %v145 = vmul.f32 %v129, %v141
    %v146 = vmul.f32 %v139, %v142
    %v147 = vperm.slane %v145, 0
    %v148 = vperm.slane %v146, 0
    %v151 = vrot.slane %v148, 4
    %v152 = vsel %vm65, %v147, %v151
    %v154 = vmul.f32 %v94, %v152
    %v156 = vperm.slane %v58, 0
    %v157 = vperm.slane %v58, 1
    %v158 = vrot.slane %v157, 4
    %v159 = vsel %vm65, %v156, %v158
    %v161 = vadd.f32 %v154, %v159
    %162 = vst [vmem:[#allocation8] sm:$0xff] %v161
    // Predicated region
    $region26: #{tpu_custom_call.1} parent=1 // pred_check
      _
    $region27: #{tpu_custom_call.1} parent=1 // pred_check_branch
      %164 = sbr.rel (0) target = $region29
    $region28: #{tpu_custom_call.1} parent=1 // pred_region
      %166 = vsyncadd [#allocation4], 0
      %s168 = sshll.u32 [#allocation8], 4
      %s169 = int_to_ptr.vmem [resolvable:$true] %s168
      %s170 = sshll.u32 %s3, 4
      %s171 = int_to_ptr.hbm [resolvable:$true] %s170
      %173 = dma.vmem_to_hbm [thread:$0]  %s169, 128, %s171, [#allocation4]
    $region29: #{tpu_custom_call.1} parent=1 // pred_fallthru
      _
    // Predicated region
    $region30: #{tpu_custom_call.1} parent=1 // pred_check
      _
    $region31: #{tpu_custom_call.1} parent=1 // pred_check_branch
      %175 = sbr.rel (0) target = $region33
    $region32: #{tpu_custom_call.1} parent=1 // pred_region
      %177 = dma.done [#allocation4], 128
    $region33: #{tpu_custom_call.1} parent=1 // pred_fallthru
      _
    %178 = vsyncpa [#allocation3], 1
    %179 = vsyncpa [#allocation6], 1
    %180 = vsyncpa [#allocation4], 1

</llo_original>
